<compile_context>
chip_gen: v7x
topology: tpu7x:2x2x1
jax: 0.10.0
libtpu: 0.0.40
codegen_flags: <defaults>
</compile_context>

<pallas_src>
import jax
import jax.numpy as jnp
import numpy as np
from jax.experimental import pallas as pl
from jax.experimental.pallas import tpu as pltpu

WEIGHTS_DTYPE = "uint4"


def pack_uint4(q):
    # glue (plain JAX): corresponds to PackedINTAsymmetricWeightsDequantizer.pack_weight
    M, N = q.shape
    lo = q[:, : N // 2].astype(jnp.uint8)
    hi = q[:, N // 2:].astype(jnp.uint8)
    return (lo | (hi << 4)).astype(jnp.uint8)


def _choose_tm(M, N, out_itemsize, vmem_budget_bytes=40 * 1024 * 1024):
    """Pick the row-tile size.

    Largest tile (multiple of 32, capped at 1024) whose double-buffered
    packed-input + output blocks plus in-kernel f32 temporaries fit a
    conservative VMEM budget valid on v5e/v6e *and* v7x, while keeping at
    least 2 grid steps when M allows so both v7x TensorCores get work.
    """
    Np = N // 2
    # 2x for double-buffered input/output blocks, ~6 f32 temps per packed byte
    per_row = 2 * (Np + N * out_itemsize + 8) + 6 * Np * 4
    tm = vmem_budget_bytes // per_row
    tm = max(32, min(1024, (tm // 32) * 32))
    if tm >= M:
        if M >= 64:  # split so the grid has >= 2 parallel steps (v7x megacore)
            tm = min(M, ((M + 1) // 2 + 31) // 32 * 32)
        else:
            tm = M
    return int(tm)


def _dequant_kernel(packed_ref, sz_ref, out_ref):
    # packed_ref: (TM, Np) uint8, sz_ref: (TM, 2) f32 [scale | zero_point],
    # out_ref: (TM, N) result_dtype with N = 2 * Np.
    tm, half = packed_ref.shape

    if tm % 4 == 0 and half % 4 == 0:
        # Fast path: mask/shift at 32-bit vreg density.  bitcast packs 4 uint8
        # values per uint32 (pure reinterpretation, no data movement); the
        # per-byte nibble masks are byte-position preserving, so bitcasting
        # back to uint8 restores each element to its original (row, col).
        mask = jnp.uint32(0x0F0F0F0F)
        p32 = pltpu.bitcast(packed_ref[...], jnp.uint32)
        lo_u8 = pltpu.bitcast(p32 & mask, jnp.uint8)
        hi_u8 = pltpu.bitcast((p32 >> 4) & mask, jnp.uint8)
        lo = lo_u8.astype(jnp.int32).astype(jnp.float32)
        hi = hi_u8.astype(jnp.int32).astype(jnp.float32)
    else:
        # Fallback for tiny/odd tiles: classic widen-to-int32 extraction.
        p = packed_ref[...].astype(jnp.int32)
        lo = (p & 0xF).astype(jnp.float32)
        hi = ((p >> 4) & 0xF).astype(jnp.float32)

    # Per-row scale / zero_point; hoist the lane-broadcasts once per tile and
    # reuse them for both half-stores (JAX does not CSE broadcast_in_dim).
    scale = sz_ref[:, 0:1]                       # (TM, 1) f32
    zp = sz_ref[:, 1:2]                          # (TM, 1) f32
    scale_b = jnp.broadcast_to(scale, (tm, half))
    zp_b = jnp.broadcast_to(zp, (tm, half))

    # (q - zero_point) * scale in f32 (bit-exact asymmetric dequant), then cast.
    # Both stores start at a multiple of 128 lanes -> unmasked full-lane vst.
    out_ref[:, :half] = ((lo - zp_b) * scale_b).astype(out_ref.dtype)
    out_ref[:, half:] = ((hi - zp_b) * scale_b).astype(out_ref.dtype)


def dequantize_packed_int_asymmetric(packed, scale, zero_point,
                                     quantized_weight_shape, result_dtype,
                                     result_shape, weights_dtype, *, tm=None):
    assert weights_dtype == WEIGHTS_DTYPE
    M, N = quantized_weight_shape
    Np = packed.shape[-1]
    assert Np * 2 == N, "packed width must be in_features // 2"
    # Lane-dense store invariant: each half-row is a whole number of 128-lane
    # vregs, so output writes lower to unmasked vst (big measured perf lever).
    assert Np % 128 == 0, (
        "uint4 half-split packing requires in_features to be a multiple of 256")

    out_itemsize = jnp.dtype(result_dtype).itemsize
    if tm is None:
        tm = _choose_tm(M, N, out_itemsize)

    # Fuse per-row scale & zero_point into one (M, 2) f32 side input:
    # a single tiny DMA per tile instead of two.
    scale_zp = jnp.concatenate(
        [jnp.asarray(scale, jnp.float32).reshape(M, 1),
         jnp.asarray(zero_point, jnp.float32).reshape(M, 1)], axis=1)

    grid = (pl.cdiv(M, tm),)   # boundary tile (M % tm != 0) is masked by Pallas
    out = pl.pallas_call(
        _dequant_kernel,
        out_shape=jax.ShapeDtypeStruct((M, N), result_dtype),
        grid_spec=pltpu.PrefetchScalarGridSpec(
            num_scalar_prefetch=0,
            grid=grid,
            in_specs=[
                pl.BlockSpec((tm, Np), lambda i: (i, 0)),
                pl.BlockSpec((tm, 2), lambda i: (i, 0)),
            ],
            out_specs=pl.BlockSpec((tm, N), lambda i: (i, 0)),
        ),
        compiler_params=pltpu.CompilerParams(
            dimension_semantics=("parallel",),
            vmem_limit_bytes=64 * 1024 * 1024,
        ),
    )(packed, scale_zp)
    return out.reshape(result_shape)


class PackedINTAsymmetricWeightsDequantizerPallas:
    """JAX/Pallas equivalent of the PyTorch module."""

    def __init__(self, scale, zero_point, quantized_weight_shape, result_dtype,
                 result_shape, original_shape, weights_dtype, **kwargs):
        self.weights_dtype = weights_dtype
        self.use_quantized_matmul = False
        self.original_shape = original_shape
        self.quantized_weight_shape = quantized_weight_shape
        self.result_dtype = result_dtype
        self.result_shape = result_shape
        self.scale = scale
        self.zero_point = zero_point

    def pack_weight(self, weight):
        return pack_uint4(weight)

    def __call__(self, weight, **kwargs):
        return dequantize_packed_int_asymmetric(
            weight, self.scale, self.zero_point, self.quantized_weight_shape,
            self.result_dtype, self.result_shape, self.weights_dtype)


if __name__ == "__main__":
    key = jax.random.PRNGKey(0)

    def run_case(M, N):
        k1, k2, k3 = jax.random.split(jax.random.fold_in(key, M * 131 + N), 3)
        # deterministic synthetic quantized weight (uint4 codes in [0, 15])
        q = jax.random.randint(k1, (M, N), 0, 16, dtype=jnp.int32).astype(jnp.uint8)
        scale = jax.random.uniform(k2, (M, 1), jnp.float32) * 0.02 + 0.001
        zero_point = jax.random.randint(k3, (M, 1), 0, 16, jnp.int32).astype(jnp.float32)

        deq = PackedINTAsymmetricWeightsDequantizerPallas(
            scale=scale,
            zero_point=zero_point,
            quantized_weight_shape=(M, N),
            result_dtype=jnp.bfloat16,
            result_shape=(M, N),
            original_shape=(M, N),
            weights_dtype=WEIGHTS_DTYPE,
        )

        packed = deq.pack_weight(q)          # (M, N//2) uint8
        out = jax.block_until_ready(deq(packed))   # (M, N) bfloat16

        # pure-JAX reference: (q - zp) * scale, cast to result_dtype
        ref = ((q.astype(jnp.float32) - zero_point) * scale).astype(jnp.bfloat16)
        assert out.shape == (M, N) and out.dtype == jnp.bfloat16
        np.testing.assert_allclose(np.asarray(out, dtype=np.float32),
                                   np.asarray(ref, dtype=np.float32),
                                   rtol=0, atol=0)

    run_case(256, 512)   # divisible case: 2 parallel row tiles, bitcast fast path
    run_case(160, 256)   # M not divisible by the chosen tile: masked boundary tile
    print("KERNEL_OK")
</pallas_src>

<mosaic_0001>
module attributes {stable_mosaic.version = 11 : i64} {
  func.func @_dequant_kernel(%arg0: i32, %arg1: memref<128x256xi8, #tpu.memory_space<vmem>>, %arg2: memref<128x2xf32, #tpu.memory_space<vmem>>, %arg3: memref<128x512xbf16, #tpu.memory_space<vmem>>) attributes {dimension_semantics = [#tpu.dimension_semantics<parallel>], iteration_bounds = array<i64: 2>, scalar_prefetch = 0 : i64, scratch_operands = 0 : i64, tpu.core_type = #tpu.core_type<tc>, window_params = [{transform_indices = @transform_0, window_bounds = array<i64: 128, 256>}, {transform_indices = @transform_1, window_bounds = array<i64: 128, 2>}, {transform_indices = @transform_2, window_bounds = array<i64: 128, 512>}]} {
    %c0 = arith.constant 0 : index
    %c0_0 = arith.constant 0 : index
    %0 = vector.load %arg1[%c0, %c0_0] : memref<128x256xi8, #tpu.memory_space<vmem>>, vector<128x256xi8>
    %1 = tpu.bitcast %0 : vector<128x256xi8> -> vector<32x256xi32>
    %c252645135_i32 = arith.constant 252645135 : i32
    %2 = vector.broadcast %c252645135_i32 : i32 to vector<32x256xi32>
    %3 = arith.andi %1, %2 : vector<32x256xi32>
    %4 = tpu.bitcast %3 : vector<32x256xi32> -> vector<128x256xi8>
    %c4_i32 = arith.constant 4 : i32
    %5 = vector.broadcast %c4_i32 : i32 to vector<32x256xi32>
    %6 = arith.shrui %1, %5 : vector<32x256xi32>
    %c252645135_i32_1 = arith.constant 252645135 : i32
    %7 = vector.broadcast %c252645135_i32_1 : i32 to vector<32x256xi32>
    %8 = arith.andi %6, %7 : vector<32x256xi32>
    %9 = tpu.bitcast %8 : vector<32x256xi32> -> vector<128x256xi8>
    %10 = arith.extui %4 : vector<128x256xi8> to vector<128x256xi32>
    %11 = arith.sitofp %10 : vector<128x256xi32> to vector<128x256xf32>
    %12 = arith.extui %9 : vector<128x256xi8> to vector<128x256xi32>
    %13 = arith.sitofp %12 : vector<128x256xi32> to vector<128x256xf32>
    %c0_2 = arith.constant 0 : index
    %c0_3 = arith.constant 0 : index
    %14 = vector.load %arg2[%c0_2, %c0_3] : memref<128x2xf32, #tpu.memory_space<vmem>>, vector<128x1xf32>
    %c0_4 = arith.constant 0 : index
    %c1 = arith.constant 1 : index
    %15 = vector.load %arg2[%c0_4, %c1] : memref<128x2xf32, #tpu.memory_space<vmem>>, vector<128x1xf32>
    %16 = vector.shape_cast %14 : vector<128x1xf32> to vector<128x1xf32>
    %17 = vector.broadcast %16 : vector<128x1xf32> to vector<128x256xf32>
    %18 = vector.shape_cast %15 : vector<128x1xf32> to vector<128x1xf32>
    %19 = vector.broadcast %18 : vector<128x1xf32> to vector<128x256xf32>
    %20 = arith.subf %11, %19 : vector<128x256xf32>
    %21 = arith.mulf %20, %17 : vector<128x256xf32>
    %22 = arith.truncf %21 : vector<128x256xf32> to vector<128x256xbf16>
    %c0_5 = arith.constant 0 : index
    %c0_6 = arith.constant 0 : index
    %23 = vector.load %arg3[%c0_5, %c0_6] : memref<128x512xbf16, #tpu.memory_space<vmem>>, vector<128x256xbf16>
    tpu.vector_store %arg3[%c0_5, %c0_6], %22 {strides = array<i32>} : memref<128x512xbf16, #tpu.memory_space<vmem>>, vector<128x256xbf16>,
    %24 = arith.subf %13, %19 : vector<128x256xf32>
    %25 = arith.mulf %24, %17 : vector<128x256xf32>
    %26 = arith.truncf %25 : vector<128x256xf32> to vector<128x256xbf16>
    %c0_7 = arith.constant 0 : index
    %c256 = arith.constant 256 : index
    %27 = vector.load %arg3[%c0_7, %c256] : memref<128x512xbf16, #tpu.memory_space<vmem>>, vector<128x256xbf16>
    tpu.vector_store %arg3[%c0_7, %c256], %26 {strides = array<i32>} : memref<128x512xbf16, #tpu.memory_space<vmem>>, vector<128x256xbf16>,
    return
  }
  func.func @transform_0(%arg0: i32) -> (i32, i32) {
    %c0_i32 = arith.constant 0 : i32
    %c0_i32_0 = arith.constant 0 : i32
    return %arg0, %c0_i32 : i32, i32
  }
  func.func @transform_1(%arg0: i32) -> (i32, i32) {
    %c0_i32 = arith.constant 0 : i32
    %c0_i32_0 = arith.constant 0 : i32
    return %arg0, %c0_i32 : i32, i32
  }
  func.func @transform_2(%arg0: i32) -> (i32, i32) {
    %c0_i32 = arith.constant 0 : i32
    %c0_i32_0 = arith.constant 0 : i32
    return %arg0, %c0_i32 : i32, i32
  }
}

</mosaic_0001>

<llo_original>
// kernel: tpu_custom_call.1
$region0: #{tpu_custom_call.1}
  #allocation0 [shape = 'u32[]', space=smem, size = 0x4, offset = 0x4, fixed_abs, tag = 'smem constant byte address 0x4 - core index']
  #allocation1 [shape = 'u32[144,128]{1,0:T(1,128)}', space=vmem, size = 0x12000, scoped, tag = 'internal scratch']
  %s0 = inlined_call_operand.hbm [shape: u8[256,256], index: 0, kind: input, shape index: {}]
  %s1 = inlined_call_operand.hbm [shape: f32[256,2], index: 1, kind: input, shape index: {}]
  %s2 = inlined_call_operand.hbm [shape: bf16[256,512], index: 2, kind: output, shape index: {}]
  %s3 = sld [smem:[#allocation0]]
  $region49: #{tpu_custom_call.1} parent=0
    _
  %s5 = ssub.s32 1, %s3
  %s6 = scalar_select 0, %s5, %s3
  $region1: #{tpu_custom_call.1} parent=0
    #allocation2 [shape = 'u8[65536]{0}', space=vmem, size = 0x10000, scoped, tag = 'input window, operand 0']
    #allocation3 [shape = 's32[2]{0}', space=sflag, size = 0x8, scoped, tag = 'scoped memory for tpu_custom_call.1']
    #allocation4 [shape = 's32[2]{0}', space=sflag, size = 0x8, scoped, tag = 'scoped memory for tpu_custom_call.1']
    #allocation5 [shape = 'u8[131072]{0}', space=vmem, size = 0x20000, scoped, tag = 'input window, operand 1']
    #allocation6 [shape = 's32[2]{0}', space=sflag, size = 0x8, scoped, tag = 'scoped memory for tpu_custom_call.1']
    #allocation7 [shape = 'u8[262144]{0}', space=vmem, size = 0x40000, scoped, tag = 'output window, operand 0']
    %7 = vsyncpa [#allocation3], 0
    %s8 = scalar_lea.sflag [#allocation3], 1
    %9 = vsyncpa %s8, 0
    %10 = vsyncpa [#allocation6], 0
    %s11 = scalar_lea.sflag [#allocation6], 1
    %12 = vsyncpa %s11, 0
    %13 = vsyncpa [#allocation4], 0
    %s14 = scalar_lea.sflag [#allocation4], 1
    %15 = vsyncpa %s14, 0
    loop: start=0, step=1, limit=4
    $region2: #{tpu_custom_call.1} parent=1 // loop_pre_header
      _
    $region3: #{tpu_custom_call.1} parent=1 // loop_header
      %s17 = sphi 0, %s21
      %p18 = scmp.ge.s32.totalorder %s17, 4
      %s27 = sphi 0, %s29
      %s30 = sphi 0, %s27
      %s31 = sphi 0, %s30
      %s47 = sphi 0, %s31
      %s53 = sphi 0, %s55
      %s56 = sphi 0, %s53
      %s57 = sphi 0, %s56
      %s73 = sphi 0, %s57
      %s79 = sphi 0, %s81
      %s82 = sphi 0, %s79
      %s83 = sphi 0, %s82
      %s99 = sphi 0, %s83
    $region4: #{tpu_custom_call.1} parent=1 // loop_header_branch
      %20 = sbr.rel (%p18) target = $region8
    $region5: #{tpu_custom_call.1} parent=1 // loop_body
      %s22 = ssub.s32 %s17, 1
      %s23 = ssub.s32 %s17, 2
      %s24 = sadd.s32 %s17, 1
      %s25 = ssub.s32 %s17, %s24
      %p26 = scmp.eq.s32.totalorder %s25, 0
      %s28 = sadd.s32 %s27, 1
      %s29 = scalar_select %p26, %s27, %s28
      %p32 = pneg %p26
      %p33 = scmp.eq.s32.totalorder %s17, 1
      %p34 = por %p32, %p33
      %p35 = scmp.ne.s32.totalorder %s27, %s30
      %p36 = scmp.eq.s32.totalorder %s17, 0
      %p37 = por %p35, %p36
      %p38 = scmp.ne.s32.totalorder %s27, %s30
      %p39 = scmp.eq.s32.totalorder %s22, 1
      %p40 = por %p38, %p39
      %p41 = scmp.ne.s32.totalorder %s30, %s31
      %p42 = scmp.eq.s32.totalorder %s22, 0
      %p43 = por %p41, %p42
      %p44 = scmp.ne.s32.totalorder %s30, %s31
      %p45 = scmp.eq.s32.totalorder %s23, 1
      %p46 = por %p44, %p45
      %p48 = scmp.ne.s32.totalorder %s31, %s47
      %p49 = scmp.eq.s32.totalorder %s23, 0
      %p50 = por %p48, %p49
      %s51 = ssub.s32 %s17, %s24
      %p52 = scmp.eq.s32.totalorder %s51, 0
      %s54 = sadd.s32 %s53, 1
      %s55 = scalar_select %p52, %s53, %s54
      %p58 = pneg %p52
      %p59 = scmp.eq.s32.totalorder %s17, 1
      %p60 = por %p58, %p59
      %p61 = scmp.ne.s32.totalorder %s53, %s56
      %p62 = scmp.eq.s32.totalorder %s17, 0
      %p63 = por %p61, %p62
      %p64 = scmp.ne.s32.totalorder %s53, %s56
      %p65 = scmp.eq.s32.totalorder %s22, 1
      %p66 = por %p64, %p65
      %p67 = scmp.ne.s32.totalorder %s56, %s57
      %p68 = scmp.eq.s32.totalorder %s22, 0
      %p69 = por %p67, %p68
      %p70 = scmp.ne.s32.totalorder %s56, %s57
      %p71 = scmp.eq.s32.totalorder %s23, 1
      %p72 = por %p70, %p71
      %p74 = scmp.ne.s32.totalorder %s57, %s73
      %p75 = scmp.eq.s32.totalorder %s23, 0
      %p76 = por %p74, %p75
      %s77 = ssub.s32 %s17, %s24
      %p78 = scmp.eq.s32.totalorder %s77, 0
      %s80 = sadd.s32 %s79, 1
      %s81 = scalar_select %p78, %s79, %s80
      %p84 = pneg %p78
      %p85 = scmp.eq.s32.totalorder %s17, 1
      %p86 = por %p84, %p85
      %p87 = scmp.ne.s32.totalorder %s79, %s82
      %p88 = scmp.eq.s32.totalorder %s17, 0
      %p89 = por %p87, %p88
      %p90 = scmp.ne.s32.totalorder %s79, %s82
      %p91 = scmp.eq.s32.totalorder %s22, 1
      %p92 = por %p90, %p91
      %p93 = scmp.ne.s32.totalorder %s82, %s83
      %p94 = scmp.eq.s32.totalorder %s22, 0
      %p95 = por %p93, %p94
      %p96 = scmp.ne.s32.totalorder %s82, %s83
      %p97 = scmp.eq.s32.totalorder %s23, 1
      %p98 = por %p96, %p97
      %p100 = scmp.ne.s32.totalorder %s83, %s99
      %p101 = scmp.eq.s32.totalorder %s23, 0
      %p102 = por %p100, %p101
      %p103 = scmp.le.s32.totalorder 1, %s17
      %p104 = scmp.lt.s32.totalorder %s17, 3
      %p105 = pnand %p103, %p104
      %p106 = pneg %p105
      // Predicated region
      $region9: #{tpu_custom_call.1} parent=5 // pred_check
        _
      $region10: #{tpu_custom_call.1} parent=5 // pred_check_branch
        %108 = sbr.rel (%p105) target = $region12
      $region11: #{tpu_custom_call.1} parent=5 // pred_region
        %s109 = ssub.s32 %s17, 1
      $region12: #{tpu_custom_call.1} parent=5 // pred_fallthru
        _
      %p110 = scmp.lt.s32.totalorder %s17, 2
      // Predicated region
      $region13: #{tpu_custom_call.1} parent=5 // pred_check
        %p111 = pneg %p110
      $region14: #{tpu_custom_call.1} parent=5 // pred_check_branch
        %113 = sbr.rel (%p111) target = $region16
      $region15: #{tpu_custom_call.1} parent=5 // pred_region
        // Predicated region
        $region17: #{tpu_custom_call.1} parent=15 // pred_check
          %p114 = pneg %p37
        $region18: #{tpu_custom_call.1} parent=15 // pred_check_branch
          %116 = sbr.rel (%p114) target = $region20
        $region19: #{tpu_custom_call.1} parent=15 // pred_region
          %s117 = sand.u32 %s27, 1
          %s118 = scalar_lea.sflag [#allocation3], %s117
          %s119 = sand.u32 %s27, 1
          %s120 = smul.addr %s119, 64
          %s121 = scalar_lea.vmem [#allocation2], %s120
          %s122 = smul.u32 4, %s17
          %s124 = ssub.s32 1024, 1024
          %125 = vsyncadd %s118, %s124
          %s126 = smul.addr %s122, 2
          %s127 = smul.addr %s126, 128
          %s128 = scalar_lea.hbm %s0, %s127
          %s129 = sshll.u32 %s121, 4
          %s130 = int_to_ptr.vmem [resolvable:$true] %s129
          %135 = dma.hbm_to_vmem [thread:$0]  %s128, 1024, %s130, %s118, 256, 256, 16
        $region20: #{tpu_custom_call.1} parent=15 // pred_fallthru
          _
        // Predicated region
        $region21: #{tpu_custom_call.1} parent=15 // pred_check
          %p136 = pneg %p63
        $region22: #{tpu_custom_call.1} parent=15 // pred_check_branch
          %138 = sbr.rel (%p136) target = $region24
        $region23: #{tpu_custom_call.1} parent=15 // pred_region
          %s139 = sand.u32 %s53, 1
          %s140 = scalar_lea.sflag [#allocation6], %s139
          %s141 = sand.u32 %s53, 1
          %s142 = smul.addr %s141, 128
          %s143 = scalar_lea.vmem [#allocation5], %s142
          %s144 = smul.u32 16, %s17
          %s146 = ssub.s32 2048, 2048
          %147 = vsyncadd %s140, %s146
          %s148 = smul.addr %s144, 128
          %s149 = scalar_lea.hbm %s1, %s148
          %s150 = sshll.u32 %s143, 4
          %s151 = int_to_ptr.vmem [resolvable:$true] %s150
          %156 = dma.hbm_to_vmem [thread:$0]  %s149, 2048, %s151, %s140, 128, 128, 8
        $region24: #{tpu_custom_call.1} parent=15 // pred_fallthru
          _
      $region16: #{tpu_custom_call.1} parent=5 // pred_fallthru
        _
      %p157 = scmp.le.s32.totalorder 1, %s17
      %p158 = scmp.lt.s32.totalorder %s17, 3
      %p159 = pnand %p157, %p158
      %p160 = pneg %p159
      // Predicated region
      $region25: #{tpu_custom_call.1} parent=5 // pred_check
        _
      $region26: #{tpu_custom_call.1} parent=5 // pred_check_branch
        %162 = sbr.rel (%p159) target = $region28
      $region27: #{tpu_custom_call.1} parent=5 // pred_region
        %s163 = ssub.s32 %s17, 1
        %s164 = sand.u32 %s30, 1
        %s165 = scalar_lea.sflag [#allocation3], %s164
        %s166 = sand.u32 %s30, 1
        %s167 = smul.addr %s166, 64
        %s168 = scalar_lea.vmem [#allocation2], %s167
        // Predicated region
        $region29: #{tpu_custom_call.1} parent=27 // pred_check
          %p169 = pneg %p43
        $region30: #{tpu_custom_call.1} parent=27 // pred_check_branch
          %171 = sbr.rel (%p169) target = $region32
        $region31: #{tpu_custom_call.1} parent=27 // pred_region
          %172 = dma.done %s165, 1024
        $region32: #{tpu_custom_call.1} parent=27 // pred_fallthru
          _
        %s173 = sand.u32 %s56, 1
        %s174 = scalar_lea.sflag [#allocation6], %s173
        %s175 = sand.u32 %s56, 1
        %s176 = smul.addr %s175, 128
        %s177 = scalar_lea.vmem [#allocation5], %s176
        // Predicated region
        $region33: #{tpu_custom_call.1} parent=27 // pred_check
          %p178 = pneg %p69
        $region34: #{tpu_custom_call.1} parent=27 // pred_check_branch
          %180 = sbr.rel (%p178) target = $region36
        $region35: #{tpu_custom_call.1} parent=27 // pred_region
          %181 = dma.done %s174, 2048
        $region36: #{tpu_custom_call.1} parent=27 // pred_fallthru
          _
        %s182 = sand.u32 %s30, 1
        %s183 = scalar_lea.sflag [#allocation3], %s182
        %s184 = sand.u32 %s30, 1
        %s185 = smul.addr %s184, 64
        %s186 = scalar_lea.vmem [#allocation2], %s185
        %p187 = pneg %p43
        %p188 = pneg %p40
        %s189 = sand.u32 %s56, 1
        %s190 = scalar_lea.sflag [#allocation6], %s189
        %s191 = sand.u32 %s56, 1
        %s192 = smul.addr %s191, 128
        %s193 = scalar_lea.vmem [#allocation5], %s192
        %p194 = pneg %p69
        %p195 = pneg %p66
        %p196 = pneg %p95
        %p197 = pneg %p92
        %s198 = sand.u32 %s82, 1
        %s199 = scalar_lea.sflag [#allocation4], %s198
        %s200 = sand.u32 %s82, 1
        %s201 = smul.addr %s200, 256
        %s202 = scalar_lea.vmem [#allocation7], %s201
        %s203 = smul.u32 4, %s22
        %s204 = smul.u32 16, %s22
        %s205 = smul.u32 16, %s22
        %v206 = vld [vmem:[%s168] sm:$0xff]
        %v207 = vld [vmem:[%s168 + $0x8] sm:$0xff]
        %v208 = vld [vmem:[%s168 + $0x10] sm:$0xff]
        %v209 = vld [vmem:[%s168 + $0x18] sm:$0xff]
        %v210 = vld [vmem:[%s168 + $0x20] sm:$0xff]
        %v211 = vld [vmem:[%s168 + $0x28] sm:$0xff]
        %v212 = vld [vmem:[%s168 + $0x30] sm:$0xff]
        %v213 = vld [vmem:[%s168 + $0x38] sm:$0xff]
        %v222 = vand.u32 %v206, 252645135
        %v223 = vand.u32 %v207, 252645135
        %v224 = vand.u32 %v208, 252645135
        %v225 = vand.u32 %v209, 252645135
        %v226 = vand.u32 %v210, 252645135
        %v227 = vand.u32 %v211, 252645135
        %v228 = vand.u32 %v212, 252645135
        %v229 = vand.u32 %v213, 252645135
        %v238 = vshrl.u32 %v206, 4
        %v239 = vshrl.u32 %v207, 4
        %v240 = vshrl.u32 %v208, 4
        %v241 = vshrl.u32 %v209, 4
        %v242 = vshrl.u32 %v210, 4
        %v243 = vshrl.u32 %v211, 4
        %v244 = vshrl.u32 %v212, 4
        %v245 = vshrl.u32 %v213, 4
        %v246 = vand.u32 %v238, 252645135
        %v247 = vand.u32 %v239, 252645135
        %v248 = vand.u32 %v240, 252645135
        %v249 = vand.u32 %v241, 252645135
        %v250 = vand.u32 %v242, 252645135
        %v251 = vand.u32 %v243, 252645135
        %v252 = vand.u32 %v244, 252645135
        %v253 = vand.u32 %v245, 252645135
        %v262 = vunpack.c.0.s8 %v222
        %v263 = vunpack.c.0.s8 %v223
        %v264 = vunpack.c.1.s8 %v222
        %v265 = vunpack.c.1.s8 %v223
        %v266 = vunpack.c.2.s8 %v222
        %v267 = vunpack.c.2.s8 %v223
        %v268 = vunpack.c.3.s8 %v222
        %v269 = vunpack.c.3.s8 %v223
        %v270 = vunpack.c.0.s8 %v224
        %v271 = vunpack.c.0.s8 %v225
        %v272 = vunpack.c.1.s8 %v224
        %v273 = vunpack.c.1.s8 %v225
        %v274 = vunpack.c.2.s8 %v224
        %v275 = vunpack.c.2.s8 %v225
        %v276 = vunpack.c.3.s8 %v224
        %v277 = vunpack.c.3.s8 %v225
        %v278 = vunpack.c.0.s8 %v226
        %v279 = vunpack.c.0.s8 %v227
        %v280 = vunpack.c.1.s8 %v226
        %v281 = vunpack.c.1.s8 %v227
        %v282 = vunpack.c.2.s8 %v226
        %v283 = vunpack.c.2.s8 %v227
        %v284 = vunpack.c.3.s8 %v226
        %v285 = vunpack.c.3.s8 %v227
        %v286 = vunpack.c.0.s8 %v228
        %v287 = vunpack.c.0.s8 %v229
        %v288 = vunpack.c.1.s8 %v228
        %v289 = vunpack.c.1.s8 %v229
        %v290 = vunpack.c.2.s8 %v228
        %v291 = vunpack.c.2.s8 %v229
        %v292 = vunpack.c.3.s8 %v228
        %v293 = vunpack.c.3.s8 %v229
        %v294 = vand.u32 %v262, 255
        %v295 = vand.u32 %v263, 255
        %v296 = vand.u32 %v264, 255
        %v297 = vand.u32 %v265, 255
        %v298 = vand.u32 %v266, 255
        %v299 = vand.u32 %v267, 255
        %v300 = vand.u32 %v268, 255
        %v301 = vand.u32 %v269, 255
        %v302 = vand.u32 %v270, 255
        %v303 = vand.u32 %v271, 255
        %v304 = vand.u32 %v272, 255
        %v305 = vand.u32 %v273, 255
        %v306 = vand.u32 %v274, 255
        %v307 = vand.u32 %v275, 255
        %v308 = vand.u32 %v276, 255
        %v309 = vand.u32 %v277, 255
        %v310 = vand.u32 %v278, 255
        %v311 = vand.u32 %v279, 255
        %v312 = vand.u32 %v280, 255
        %v313 = vand.u32 %v281, 255
        %v314 = vand.u32 %v282, 255
        %v315 = vand.u32 %v283, 255
        %v316 = vand.u32 %v284, 255
        %v317 = vand.u32 %v285, 255
        %v318 = vand.u32 %v286, 255
        %v319 = vand.u32 %v287, 255
        %v320 = vand.u32 %v288, 255
        %v321 = vand.u32 %v289, 255
        %v322 = vand.u32 %v290, 255
        %v323 = vand.u32 %v291, 255
        %v324 = vand.u32 %v292, 255
        %v325 = vand.u32 %v293, 255
        %v326 = vcvt.s32.f32 %v294
        %v327 = vcvt.s32.f32 %v295
        %v328 = vcvt.s32.f32 %v296
        %v329 = vcvt.s32.f32 %v297
        %v330 = vcvt.s32.f32 %v298
        %v331 = vcvt.s32.f32 %v299
        %v332 = vcvt.s32.f32 %v300
        %v333 = vcvt.s32.f32 %v301
        %v334 = vcvt.s32.f32 %v302
        %v335 = vcvt.s32.f32 %v303
        %v336 = vcvt.s32.f32 %v304
        %v337 = vcvt.s32.f32 %v305
        %v338 = vcvt.s32.f32 %v306
        %v339 = vcvt.s32.f32 %v307
        %v340 = vcvt.s32.f32 %v308
        %v341 = vcvt.s32.f32 %v309
        %v342 = vcvt.s32.f32 %v310
        %v343 = vcvt.s32.f32 %v311
        %v344 = vcvt.s32.f32 %v312
        %v345 = vcvt.s32.f32 %v313
        %v346 = vcvt.s32.f32 %v314
        %v347 = vcvt.s32.f32 %v315
        %v348 = vcvt.s32.f32 %v316
        %v349 = vcvt.s32.f32 %v317
        %v350 = vcvt.s32.f32 %v318
        %v351 = vcvt.s32.f32 %v319
        %v352 = vcvt.s32.f32 %v320
        %v353 = vcvt.s32.f32 %v321
        %v354 = vcvt.s32.f32 %v322
        %v355 = vcvt.s32.f32 %v323
        %v356 = vcvt.s32.f32 %v324
        %v357 = vcvt.s32.f32 %v325
        %v358 = vunpack.c.0.s8 %v246
        %v359 = vunpack.c.0.s8 %v247
        %v360 = vunpack.c.1.s8 %v246
        %v361 = vunpack.c.1.s8 %v247
        %v362 = vunpack.c.2.s8 %v246
        %v363 = vunpack.c.2.s8 %v247
        %v364 = vunpack.c.3.s8 %v246
        %v365 = vunpack.c.3.s8 %v247
        %v366 = vunpack.c.0.s8 %v248
        %v367 = vunpack.c.0.s8 %v249
        %v368 = vunpack.c.1.s8 %v248
        %v369 = vunpack.c.1.s8 %v249
        %v370 = vunpack.c.2.s8 %v248
        %v371 = vunpack.c.2.s8 %v249
        %v372 = vunpack.c.3.s8 %v248
        %v373 = vunpack.c.3.s8 %v249
        %v374 = vunpack.c.0.s8 %v250
        %v375 = vunpack.c.0.s8 %v251
        %v376 = vunpack.c.1.s8 %v250
        %v377 = vunpack.c.1.s8 %v251
        %v378 = vunpack.c.2.s8 %v250
        %v379 = vunpack.c.2.s8 %v251
        %v380 = vunpack.c.3.s8 %v250
        %v381 = vunpack.c.3.s8 %v251
        %v382 = vunpack.c.0.s8 %v252
        %v383 = vunpack.c.0.s8 %v253
        %v384 = vunpack.c.1.s8 %v252
        %v385 = vunpack.c.1.s8 %v253
        %v386 = vunpack.c.2.s8 %v252
        %v387 = vunpack.c.2.s8 %v253
        %v388 = vunpack.c.3.s8 %v252
        %v389 = vunpack.c.3.s8 %v253
        %v390 = vand.u32 %v358, 255
        %v391 = vand.u32 %v359, 255
        %v392 = vand.u32 %v360, 255
        %v393 = vand.u32 %v361, 255
        %v394 = vand.u32 %v362, 255
        %v395 = vand.u32 %v363, 255
        %v396 = vand.u32 %v364, 255
        %v397 = vand.u32 %v365, 255
        %v398 = vand.u32 %v366, 255
        %v399 = vand.u32 %v367, 255
        %v400 = vand.u32 %v368, 255
        %v401 = vand.u32 %v369, 255
        %v402 = vand.u32 %v370, 255
        %v403 = vand.u32 %v371, 255
        %v404 = vand.u32 %v372, 255
        %v405 = vand.u32 %v373, 255
        %v406 = vand.u32 %v374, 255
        %v407 = vand.u32 %v375, 255
        %v408 = vand.u32 %v376, 255
        %v409 = vand.u32 %v377, 255
        %v410 = vand.u32 %v378, 255
        %v411 = vand.u32 %v379, 255
        %v412 = vand.u32 %v380, 255
        %v413 = vand.u32 %v381, 255
        %v414 = vand.u32 %v382, 255
        %v415 = vand.u32 %v383, 255
        %v416 = vand.u32 %v384, 255
        %v417 = vand.u32 %v385, 255
        %v418 = vand.u32 %v386, 255
        %v419 = vand.u32 %v387, 255
        %v420 = vand.u32 %v388, 255
        %v421 = vand.u32 %v389, 255
        %v422 = vcvt.s32.f32 %v390
        %v423 = vcvt.s32.f32 %v391
        %v424 = vcvt.s32.f32 %v392
        %v425 = vcvt.s32.f32 %v393
        %v426 = vcvt.s32.f32 %v394
        %v427 = vcvt.s32.f32 %v395
        %v428 = vcvt.s32.f32 %v396
        %v429 = vcvt.s32.f32 %v397
        %v430 = vcvt.s32.f32 %v398
        %v431 = vcvt.s32.f32 %v399
        %v432 = vcvt.s32.f32 %v400
        %v433 = vcvt.s32.f32 %v401
        %v434 = vcvt.s32.f32 %v402
        %v435 = vcvt.s32.f32 %v403
        %v436 = vcvt.s32.f32 %v404
        %v437 = vcvt.s32.f32 %v405
        %v438 = vcvt.s32.f32 %v406
        %v439 = vcvt.s32.f32 %v407
        %v440 = vcvt.s32.f32 %v408
        %v441 = vcvt.s32.f32 %v409
        %v442 = vcvt.s32.f32 %v410
        %v443 = vcvt.s32.f32 %v411
        %v444 = vcvt.s32.f32 %v412
        %v445 = vcvt.s32.f32 %v413
        %v446 = vcvt.s32.f32 %v414
        %v447 = vcvt.s32.f32 %v415
        %v448 = vcvt.s32.f32 %v416
        %v449 = vcvt.s32.f32 %v417
        %v450 = vcvt.s32.f32 %v418
        %v451 = vcvt.s32.f32 %v419
        %v452 = vcvt.s32.f32 %v420
        %v453 = vcvt.s32.f32 %v421
        %v454 = vld [vmem:[%s177] sm:$0xff]
        %v455 = vld [vmem:[%s177 + $0x8] sm:$0xff]
        %v456 = vld [vmem:[%s177 + $0x10] sm:$0xff]
        %v457 = vld [vmem:[%s177 + $0x18] sm:$0xff]
        %v458 = vld [vmem:[%s177 + $0x20] sm:$0xff]
        %v459 = vld [vmem:[%s177 + $0x28] sm:$0xff]
        %v460 = vld [vmem:[%s177 + $0x30] sm:$0xff]
        %v461 = vld [vmem:[%s177 + $0x38] sm:$0xff]
        %v462 = vld [vmem:[%s177 + $0x40] sm:$0xff]
        %v463 = vld [vmem:[%s177 + $0x48] sm:$0xff]
        %v464 = vld [vmem:[%s177 + $0x50] sm:$0xff]
        %v465 = vld [vmem:[%s177 + $0x58] sm:$0xff]
        %v466 = vld [vmem:[%s177 + $0x60] sm:$0xff]
        %v467 = vld [vmem:[%s177 + $0x68] sm:$0xff]
        %v468 = vld [vmem:[%s177 + $0x70] sm:$0xff]
        %v469 = vld [vmem:[%s177 + $0x78] sm:$0xff]
        %471 = vset.pattern.permute.xlu0 0
        %472 = vperm.xlu0 %471, %v454
        %v473 = vpop.permute.xlu0 %472
        %476 = vset.pattern.permute.xlu0 0
        %477 = vperm.xlu0 %476, %v455
        %v478 = vpop.permute.xlu0 %477
        %481 = vset.pattern.permute.xlu0 0
        %482 = vperm.xlu0 %481, %v456
        %v483 = vpop.permute.xlu0 %482
        %486 = vset.pattern.permute.xlu0 0
        %487 = vperm.xlu0 %486, %v457
        %v488 = vpop.permute.xlu0 %487
        %491 = vset.pattern.permute.xlu0 0
        %492 = vperm.xlu0 %491, %v458
        %v493 = vpop.permute.xlu0 %492
        %496 = vset.pattern.permute.xlu0 0
        %497 = vperm.xlu0 %496, %v459
        %v498 = vpop.permute.xlu0 %497
        %501 = vset.pattern.permute.xlu0 0
        %502 = vperm.xlu0 %501, %v460
        %v503 = vpop.permute.xlu0 %502
        %506 = vset.pattern.permute.xlu0 0
        %507 = vperm.xlu0 %506, %v461
        %v508 = vpop.permute.xlu0 %507
        %511 = vset.pattern.permute.xlu0 0
        %512 = vperm.xlu0 %511, %v462
        %v513 = vpop.permute.xlu0 %512
        %516 = vset.pattern.permute.xlu0 0
        %517 = vperm.xlu0 %516, %v463
        %v518 = vpop.permute.xlu0 %517
        %521 = vset.pattern.permute.xlu0 0
        %522 = vperm.xlu0 %521, %v464
        %v523 = vpop.permute.xlu0 %522
        %526 = vset.pattern.permute.xlu0 0
        %527 = vperm.xlu0 %526, %v465
        %v528 = vpop.permute.xlu0 %527
        %531 = vset.pattern.permute.xlu0 0
        %532 = vperm.xlu0 %531, %v466
        %v533 = vpop.permute.xlu0 %532
        %536 = vset.pattern.permute.xlu0 0
        %537 = vperm.xlu0 %536, %v467
        %v538 = vpop.permute.xlu0 %537
        %541 = vset.pattern.permute.xlu0 0
        %542 = vperm.xlu0 %541, %v468
        %v543 = vpop.permute.xlu0 %542
        %546 = vset.pattern.permute.xlu0 0
        %547 = vperm.xlu0 %546, %v469
        %v548 = vpop.permute.xlu0 %547
        %550 = vset.pattern.permute.xlu0 1
        %551 = vperm.xlu0 %550, %v454
        %v552 = vpop.permute.xlu0 %551
        %554 = vset.pattern.permute.xlu0 1
        %555 = vperm.xlu0 %554, %v455
        %v556 = vpop.permute.xlu0 %555
        %558 = vset.pattern.permute.xlu0 1
        %559 = vperm.xlu0 %558, %v456
        %v560 = vpop.permute.xlu0 %559
        %562 = vset.pattern.permute.xlu0 1
        %563 = vperm.xlu0 %562, %v457
        %v564 = vpop.permute.xlu0 %563
        %566 = vset.pattern.permute.xlu0 1
        %567 = vperm.xlu0 %566, %v458
        %v568 = vpop.permute.xlu0 %567
        %570 = vset.pattern.permute.xlu0 1
        %571 = vperm.xlu0 %570, %v459
        %v572 = vpop.permute.xlu0 %571
        %574 = vset.pattern.permute.xlu0 1
        %575 = vperm.xlu0 %574, %v460
        %v576 = vpop.permute.xlu0 %575
        %578 = vset.pattern.permute.xlu0 1
        %579 = vperm.xlu0 %578, %v461
        %v580 = vpop.permute.xlu0 %579
        %582 = vset.pattern.permute.xlu0 1
        %583 = vperm.xlu0 %582, %v462
        %v584 = vpop.permute.xlu0 %583
        %586 = vset.pattern.permute.xlu0 1
        %587 = vperm.xlu0 %586, %v463
        %v588 = vpop.permute.xlu0 %587
        %590 = vset.pattern.permute.xlu0 1
        %591 = vperm.xlu0 %590, %v464
        %v592 = vpop.permute.xlu0 %591
        %594 = vset.pattern.permute.xlu0 1
        %595 = vperm.xlu0 %594, %v465
        %v596 = vpop.permute.xlu0 %595
        %598 = vset.pattern.permute.xlu0 1
        %599 = vperm.xlu0 %598, %v466
        %v600 = vpop.permute.xlu0 %599
        %602 = vset.pattern.permute.xlu0 1
        %603 = vperm.xlu0 %602, %v467
        %v604 = vpop.permute.xlu0 %603
        %606 = vset.pattern.permute.xlu0 1
        %607 = vperm.xlu0 %606, %v468
        %v608 = vpop.permute.xlu0 %607
        %610 = vset.pattern.permute.xlu0 1
        %611 = vperm.xlu0 %610, %v469
        %v612 = vpop.permute.xlu0 %611
        %v614 = vsub.f32 %v326, %v552
        %v615 = vsub.f32 %v327, %v552
        %v616 = vsub.f32 %v328, %v556
        %v617 = vsub.f32 %v329, %v556
        %v618 = vsub.f32 %v330, %v560
        %v619 = vsub.f32 %v331, %v560
        %v620 = vsub.f32 %v332, %v564
        %v621 = vsub.f32 %v333, %v564
        %v622 = vsub.f32 %v334, %v568
        %v623 = vsub.f32 %v335, %v568
        %v624 = vsub.f32 %v336, %v572
        %v625 = vsub.f32 %v337, %v572
        %v626 = vsub.f32 %v338, %v576
        %v627 = vsub.f32 %v339, %v576
        %v628 = vsub.f32 %v340, %v580
        %v629 = vsub.f32 %v341, %v580
        %v630 = vsub.f32 %v342, %v584
        %v631 = vsub.f32 %v343, %v584
        %v632 = vsub.f32 %v344, %v588
        %v633 = vsub.f32 %v345, %v588
        %v634 = vsub.f32 %v346, %v592
        %v635 = vsub.f32 %v347, %v592
        %v636 = vsub.f32 %v348, %v596
        %v637 = vsub.f32 %v349, %v596
        %v638 = vsub.f32 %v350, %v600
        %v639 = vsub.f32 %v351, %v600
        %v640 = vsub.f32 %v352, %v604
        %v641 = vsub.f32 %v353, %v604
        %v642 = vsub.f32 %v354, %v608
        %v643 = vsub.f32 %v355, %v608
        %v644 = vsub.f32 %v356, %v612
        %v645 = vsub.f32 %v357, %v612
        %v646 = vmul.f32 %v614, %v473
        %v647 = vmul.f32 %v615, %v473
        %v648 = vmul.f32 %v616, %v478
        %v649 = vmul.f32 %v617, %v478
        %v650 = vmul.f32 %v618, %v483
        %v651 = vmul.f32 %v619, %v483
        %v652 = vmul.f32 %v620, %v488
        %v653 = vmul.f32 %v621, %v488
        %v654 = vmul.f32 %v622, %v493
        %v655 = vmul.f32 %v623, %v493
        %v656 = vmul.f32 %v624, %v498
        %v657 = vmul.f32 %v625, %v498
        %v658 = vmul.f32 %v626, %v503
        %v659 = vmul.f32 %v627, %v503
        %v660 = vmul.f32 %v628, %v508
        %v661 = vmul.f32 %v629, %v508
        %v662 = vmul.f32 %v630, %v513
        %v663 = vmul.f32 %v631, %v513
        %v664 = vmul.f32 %v632, %v518
        %v665 = vmul.f32 %v633, %v518
        %v666 = vmul.f32 %v634, %v523
        %v667 = vmul.f32 %v635, %v523
        %v668 = vmul.f32 %v636, %v528
        %v669 = vmul.f32 %v637, %v528
        %v670 = vmul.f32 %v638, %v533
        %v671 = vmul.f32 %v639, %v533
        %v672 = vmul.f32 %v640, %v538
        %v673 = vmul.f32 %v641, %v538
        %v674 = vmul.f32 %v642, %v543
        %v675 = vmul.f32 %v643, %v543
        %v676 = vmul.f32 %v644, %v548
        %v677 = vmul.f32 %v645, %v548
        %v678 = vpack.c.bf16 %v648, %v646
        %v679 = vpack.c.bf16 %v649, %v647
        %v680 = vpack.c.bf16 %v652, %v650
        %v681 = vpack.c.bf16 %v653, %v651
        %v682 = vpack.c.bf16 %v656, %v654
        %v683 = vpack.c.bf16 %v657, %v655
        %v684 = vpack.c.bf16 %v660, %v658
        %v685 = vpack.c.bf16 %v661, %v659
        %v686 = vpack.c.bf16 %v664, %v662
        %v687 = vpack.c.bf16 %v665, %v663
        %v688 = vpack.c.bf16 %v668, %v666
        %v689 = vpack.c.bf16 %v669, %v667
        %v690 = vpack.c.bf16 %v672, %v670
        %v691 = vpack.c.bf16 %v673, %v671
        %v692 = vpack.c.bf16 %v676, %v674
        %v693 = vpack.c.bf16 %v677, %v675
        %v710 = vunpack.c.l.b16 %v678
        %v711 = vunpack.c.l.b16 %v679
        %v712 = vunpack.c.h.b16 %v678
        %v713 = vunpack.c.h.b16 %v679
        %v714 = vunpack.c.l.b16 %v680
        %v715 = vunpack.c.l.b16 %v681
        %v716 = vunpack.c.h.b16 %v680
        %v717 = vunpack.c.h.b16 %v681
        %v718 = vunpack.c.l.b16 %v682
        %v719 = vunpack.c.l.b16 %v683
        %v720 = vunpack.c.h.b16 %v682
        %v721 = vunpack.c.h.b16 %v683
        %v722 = vunpack.c.l.b16 %v684
        %v723 = vunpack.c.l.b16 %v685
        %v724 = vunpack.c.h.b16 %v684
        %v725 = vunpack.c.h.b16 %v685
        %v726 = vunpack.c.l.b16 %v686
        %v727 = vunpack.c.l.b16 %v687
        %v728 = vunpack.c.h.b16 %v686
        %v729 = vunpack.c.h.b16 %v687
        %v730 = vunpack.c.l.b16 %v688
        %v731 = vunpack.c.l.b16 %v689
        %v732 = vunpack.c.h.b16 %v688
        %v733 = vunpack.c.h.b16 %v689
        %v734 = vunpack.c.l.b16 %v690
        %v735 = vunpack.c.l.b16 %v691
        %v736 = vunpack.c.h.b16 %v690
        %v737 = vunpack.c.h.b16 %v691
        %v738 = vunpack.c.l.b16 %v692
        %v739 = vunpack.c.l.b16 %v693
        %v740 = vunpack.c.h.b16 %v692
        %v741 = vunpack.c.h.b16 %v693
        %v742 = vpack.c.b16 %v711, %v710
        %v743 = vpack.c.b16 %v713, %v712
        %v744 = vpack.c.b16 %v715, %v714
        %v745 = vpack.c.b16 %v717, %v716
        %v746 = vpack.c.b16 %v719, %v718
        %v747 = vpack.c.b16 %v721, %v720
        %v748 = vpack.c.b16 %v723, %v722
        %v749 = vpack.c.b16 %v725, %v724
        %v750 = vpack.c.b16 %v727, %v726
        %v751 = vpack.c.b16 %v729, %v728
        %v752 = vpack.c.b16 %v731, %v730
        %v753 = vpack.c.b16 %v733, %v732
        %v754 = vpack.c.b16 %v735, %v734
        %v755 = vpack.c.b16 %v737, %v736
        %v756 = vpack.c.b16 %v739, %v738
        %v757 = vpack.c.b16 %v741, %v740
        %774 = vst [vmem:[%s202] sm:$0xff] %v742
        %775 = vst [vmem:[%s202 + $0x10] sm:$0xff] %v743
        %776 = vst [vmem:[%s202 + $0x20] sm:$0xff] %v744
        %777 = vst [vmem:[%s202 + $0x30] sm:$0xff] %v745
        %778 = vst [vmem:[%s202 + $0x40] sm:$0xff] %v746
        %779 = vst [vmem:[%s202 + $0x50] sm:$0xff] %v747
        %780 = vst [vmem:[%s202 + $0x60] sm:$0xff] %v748
        %781 = vst [vmem:[%s202 + $0x70] sm:$0xff] %v749
        %782 = vst [vmem:[%s202 + $0x80] sm:$0xff] %v750
        %783 = vst [vmem:[%s202 + $0x90] sm:$0xff] %v751
        %784 = vst [vmem:[%s202 + $0xa0] sm:$0xff] %v752
        %785 = vst [vmem:[%s202 + $0xb0] sm:$0xff] %v753
        %786 = vst [vmem:[%s202 + $0xc0] sm:$0xff] %v754
        %787 = vst [vmem:[%s202 + $0xd0] sm:$0xff] %v755
        %788 = vst [vmem:[%s202 + $0xe0] sm:$0xff] %v756
        %789 = vst [vmem:[%s202 + $0xf0] sm:$0xff] %v757
        %v790 = vsub.f32 %v422, %v552
        %v791 = vsub.f32 %v423, %v552
        %v792 = vsub.f32 %v424, %v556
        %v793 = vsub.f32 %v425, %v556
        %v794 = vsub.f32 %v426, %v560
        %v795 = vsub.f32 %v427, %v560
        %v796 = vsub.f32 %v428, %v564
        %v797 = vsub.f32 %v429, %v564
        %v798 = vsub.f32 %v430, %v568
        %v799 = vsub.f32 %v431, %v568
        %v800 = vsub.f32 %v432, %v572
        %v801 = vsub.f32 %v433, %v572
        %v802 = vsub.f32 %v434, %v576
        %v803 = vsub.f32 %v435, %v576
        %v804 = vsub.f32 %v436, %v580
        %v805 = vsub.f32 %v437, %v580
        %v806 = vsub.f32 %v438, %v584
        %v807 = vsub.f32 %v439, %v584
        %v808 = vsub.f32 %v440, %v588
        %v809 = vsub.f32 %v441, %v588
        %v810 = vsub.f32 %v442, %v592
        %v811 = vsub.f32 %v443, %v592
        %v812 = vsub.f32 %v444, %v596
        %v813 = vsub.f32 %v445, %v596
        %v814 = vsub.f32 %v446, %v600
        %v815 = vsub.f32 %v447, %v600
        %v816 = vsub.f32 %v448, %v604
        %v817 = vsub.f32 %v449, %v604
        %v818 = vsub.f32 %v450, %v608
        %v819 = vsub.f32 %v451, %v608
        %v820 = vsub.f32 %v452, %v612
        %v821 = vsub.f32 %v453, %v612
        %v822 = vmul.f32 %v790, %v473
        %v823 = vmul.f32 %v791, %v473
        %v824 = vmul.f32 %v792, %v478
        %v825 = vmul.f32 %v793, %v478
        %v826 = vmul.f32 %v794, %v483
        %v827 = vmul.f32 %v795, %v483
        %v828 = vmul.f32 %v796, %v488
        %v829 = vmul.f32 %v797, %v488
        %v830 = vmul.f32 %v798, %v493
        %v831 = vmul.f32 %v799, %v493
        %v832 = vmul.f32 %v800, %v498
        %v833 = vmul.f32 %v801, %v498
        %v834 = vmul.f32 %v802, %v503
        %v835 = vmul.f32 %v803, %v503
        %v836 = vmul.f32 %v804, %v508
        %v837 = vmul.f32 %v805, %v508
        %v838 = vmul.f32 %v806, %v513
        %v839 = vmul.f32 %v807, %v513
        %v840 = vmul.f32 %v808, %v518
        %v841 = vmul.f32 %v809, %v518
        %v842 = vmul.f32 %v810, %v523
        %v843 = vmul.f32 %v811, %v523
        %v844 = vmul.f32 %v812, %v528
        %v845 = vmul.f32 %v813, %v528
        %v846 = vmul.f32 %v814, %v533
        %v847 = vmul.f32 %v815, %v533
        %v848 = vmul.f32 %v816, %v538
        %v849 = vmul.f32 %v817, %v538
        %v850 = vmul.f32 %v818, %v543
        %v851 = vmul.f32 %v819, %v543
        %v852 = vmul.f32 %v820, %v548
        %v853 = vmul.f32 %v821, %v548
        %v854 = vpack.c.bf16 %v824, %v822
        %v855 = vpack.c.bf16 %v825, %v823
        %v856 = vpack.c.bf16 %v828, %v826
        %v857 = vpack.c.bf16 %v829, %v827
        %v858 = vpack.c.bf16 %v832, %v830
        %v859 = vpack.c.bf16 %v833, %v831
        %v860 = vpack.c.bf16 %v836, %v834
        %v861 = vpack.c.bf16 %v837, %v835
        %v862 = vpack.c.bf16 %v840, %v838
        %v863 = vpack.c.bf16 %v841, %v839
        %v864 = vpack.c.bf16 %v844, %v842
        %v865 = vpack.c.bf16 %v845, %v843
        %v866 = vpack.c.bf16 %v848, %v846
        %v867 = vpack.c.bf16 %v849, %v847
        %v868 = vpack.c.bf16 %v852, %v850
        %v869 = vpack.c.bf16 %v853, %v851
        %v886 = vunpack.c.l.b16 %v854
        %v887 = vunpack.c.l.b16 %v855
        %v888 = vunpack.c.h.b16 %v854
        %v889 = vunpack.c.h.b16 %v855
        %v890 = vunpack.c.l.b16 %v856
        %v891 = vunpack.c.l.b16 %v857
        %v892 = vunpack.c.h.b16 %v856
        %v893 = vunpack.c.h.b16 %v857
        %v894 = vunpack.c.l.b16 %v858
        %v895 = vunpack.c.l.b16 %v859
        %v896 = vunpack.c.h.b16 %v858
        %v897 = vunpack.c.h.b16 %v859
        %v898 = vunpack.c.l.b16 %v860
        %v899 = vunpack.c.l.b16 %v861
        %v900 = vunpack.c.h.b16 %v860
        %v901 = vunpack.c.h.b16 %v861
        %v902 = vunpack.c.l.b16 %v862
        %v903 = vunpack.c.l.b16 %v863
        %v904 = vunpack.c.h.b16 %v862
        %v905 = vunpack.c.h.b16 %v863
        %v906 = vunpack.c.l.b16 %v864
        %v907 = vunpack.c.l.b16 %v865
        %v908 = vunpack.c.h.b16 %v864
        %v909 = vunpack.c.h.b16 %v865
        %v910 = vunpack.c.l.b16 %v866
        %v911 = vunpack.c.l.b16 %v867
        %v912 = vunpack.c.h.b16 %v866
        %v913 = vunpack.c.h.b16 %v867
        %v914 = vunpack.c.l.b16 %v868
        %v915 = vunpack.c.l.b16 %v869
        %v916 = vunpack.c.h.b16 %v868
        %v917 = vunpack.c.h.b16 %v869
        %v918 = vpack.c.b16 %v887, %v886
        %v919 = vpack.c.b16 %v889, %v888
        %v920 = vpack.c.b16 %v891, %v890
        %v921 = vpack.c.b16 %v893, %v892
        %v922 = vpack.c.b16 %v895, %v894
        %v923 = vpack.c.b16 %v897, %v896
        %v924 = vpack.c.b16 %v899, %v898
        %v925 = vpack.c.b16 %v901, %v900
        %v926 = vpack.c.b16 %v903, %v902
        %v927 = vpack.c.b16 %v905, %v904
        %v928 = vpack.c.b16 %v907, %v906
        %v929 = vpack.c.b16 %v909, %v908
        %v930 = vpack.c.b16 %v911, %v910
        %v931 = vpack.c.b16 %v913, %v912
        %v932 = vpack.c.b16 %v915, %v914
        %v933 = vpack.c.b16 %v917, %v916
        %950 = vst [vmem:[%s202 + $0x8] sm:$0xff] %v918
        %951 = vst [vmem:[%s202 + $0x18] sm:$0xff] %v919
        %952 = vst [vmem:[%s202 + $0x28] sm:$0xff] %v920
        %953 = vst [vmem:[%s202 + $0x38] sm:$0xff] %v921
        %954 = vst [vmem:[%s202 + $0x48] sm:$0xff] %v922
        %955 = vst [vmem:[%s202 + $0x58] sm:$0xff] %v923
        %956 = vst [vmem:[%s202 + $0x68] sm:$0xff] %v924
        %957 = vst [vmem:[%s202 + $0x78] sm:$0xff] %v925
        %958 = vst [vmem:[%s202 + $0x88] sm:$0xff] %v926
        %959 = vst [vmem:[%s202 + $0x98] sm:$0xff] %v927
        %960 = vst [vmem:[%s202 + $0xa8] sm:$0xff] %v928
        %961 = vst [vmem:[%s202 + $0xb8] sm:$0xff] %v929
        %962 = vst [vmem:[%s202 + $0xc8] sm:$0xff] %v930
        %963 = vst [vmem:[%s202 + $0xd8] sm:$0xff] %v931
        %964 = vst [vmem:[%s202 + $0xe8] sm:$0xff] %v932
        %965 = vst [vmem:[%s202 + $0xf8] sm:$0xff] %v933
        %s966 = sand.u32 %s82, 1
        %s967 = scalar_lea.sflag [#allocation4], %s966
        %s968 = sand.u32 %s82, 1
        %s969 = smul.addr %s968, 256
        %s970 = scalar_lea.vmem [#allocation7], %s969
        // Predicated region
        $region37: #{tpu_custom_call.1} parent=27 // pred_check
          %p971 = pneg %p92
        $region38: #{tpu_custom_call.1} parent=27 // pred_check_branch
          %973 = sbr.rel (%p971) target = $region40
        $region39: #{tpu_custom_call.1} parent=27 // pred_region
          %s974 = smul.u32 16, %s22
          %s976 = ssub.s32 4096, 4096
          %977 = vsyncadd %s967, %s976
          %s978 = smul.addr %s974, 4
          %s979 = smul.addr %s978, 64
          %s980 = scalar_lea.hbm %s2, %s979
          %s981 = sshll.u32 %s970, 4
          %s982 = int_to_ptr.vmem [resolvable:$true] %s981
          %987 = dma.vmem_to_hbm [thread:$0]  %s982, 4096, %s980, %s967, 256, 256, 16
        $region40: #{tpu_custom_call.1} parent=27 // pred_fallthru
          _
      $region28: #{tpu_custom_call.1} parent=5 // pred_fallthru
        _
      %p988 = scmp.le.s32.totalorder 2, %s17
      // Predicated region
      $region41: #{tpu_custom_call.1} parent=5 // pred_check
        %p989 = pneg %p988
      $region42: #{tpu_custom_call.1} parent=5 // pred_check_branch
        %991 = sbr.rel (%p989) target = $region44
      $region43: #{tpu_custom_call.1} parent=5 // pred_region
        %s992 = ssub.s32 %s17, 2
        // Predicated region
        $region45: #{tpu_custom_call.1} parent=43 // pred_check
          %p993 = pneg %p98
        $region46: #{tpu_custom_call.1} parent=43 // pred_check_branch
          %995 = sbr.rel (%p993) target = $region48
        $region47: #{tpu_custom_call.1} parent=43 // pred_region
          %s996 = sand.u32 %s83, 1
          %s997 = scalar_lea.sflag [#allocation4], %s996
          %s998 = sand.u32 %s83, 1
          %s999 = smul.addr %s998, 256
          %s1000 = scalar_lea.vmem [#allocation7], %s999
          %1001 = dma.done %s997, 4096
        $region48: #{tpu_custom_call.1} parent=43 // pred_fallthru
          _
      $region44: #{tpu_custom_call.1} parent=5 // pred_fallthru
        _
    $region6: #{tpu_custom_call.1} parent=1 // loop_footer
      %s21 = sadd.s32 1, %s17
    $region7: #{tpu_custom_call.1} parent=1 // loop_footer_branch
      %16 = sbr.rel target = $region3
    $region8: #{tpu_custom_call.1} parent=1 // loop_exit
      _
    %1002 = vsyncpa [#allocation3], 1
    %s1003 = scalar_lea.sflag [#allocation3], 1
    %1004 = vsyncpa %s1003, 1
    %1005 = vsyncpa [#allocation6], 1
    %s1006 = scalar_lea.sflag [#allocation6], 1
    %1007 = vsyncpa %s1006, 1
    %1008 = vsyncpa [#allocation4], 1
    %s1009 = scalar_lea.sflag [#allocation4], 1
    %1010 = vsyncpa %s1009, 1

</llo_original>
